<compile_context>
chip_gen: v6e
topology: v6e:2x2x1
jax: 0.10.0
libtpu: 0.0.40
codegen_flags: <defaults>
</compile_context>

<pallas_src>
import jax
import jax.numpy as jnp
from jax.experimental import pallas as pl
from jax.experimental.pallas import tpu as pltpu


def _identity_kernel(x_ref, o_ref):
    # Whole-block VMEM copy (single grid step, lane-dense layout).
    o_ref[...] = x_ref[...]


def identity_forward(x: jax.Array) -> jax.Array:
    """True Identity: zero work, zero HBM traffic."""
    return x


def identity_forward_pallas(x: jax.Array) -> jax.Array:
    """Identity expressed as a single-block, lane-dense Pallas copy.

    Kept only for cases where an explicit kernel boundary is required;
    otherwise prefer `identity_forward` (returns x directly).
    """
    orig_shape = x.shape
    total = x.size

    # Present a lane-dense 2D slab to the kernel: trailing dim = 128 lanes
    # whenever possible, so stores are full unmasked vst (no vreg padding).
    if total % 128 == 0:
        x2d = x.reshape(total // 128, 128)
    else:
        # Fallback: single block over the raw array (still one grid step).
        x2d = x.reshape(1, total)

    y2d = pl.pallas_call(
        _identity_kernel,
        out_shape=jax.ShapeDtypeStruct(x2d.shape, x2d.dtype),
        # No grid: one invocation, one full-array block in VMEM.
        in_specs=[pl.BlockSpec(x2d.shape, lambda: (0, 0))],
        out_specs=pl.BlockSpec(x2d.shape, lambda: (0, 0)),
        # Reuse the input HBM buffer for the output (no extra allocation).
        input_output_aliases={0: 0},
    )(x2d)

    return y2d.reshape(orig_shape)


if __name__ == "__main__":
    # Module config (synthetic, deterministic): T=16, nchns=4, batch=2.
    T = 16
    nchns = 4
    batch = 2

    key = jax.random.PRNGKey(0)
    x = jax.random.normal(key, (batch, nchns, T), dtype=jnp.float32)

    # Zero-cost path (the "right" implementation of Identity).
    y_fast = identity_forward(x)
    assert y_fast is x or bool(jnp.all(y_fast == x))

    # Pallas path (single lane-dense block, aliased output).
    y = identity_forward_pallas(x)
    jax.block_until_ready(y)

    assert y.shape == x.shape and y.dtype == x.dtype
    assert bool(jnp.all(y == x))

    print("KERNEL_OK")
</pallas_src>

<mosaic_0001>
module attributes {stable_mosaic.version = 11 : i64} {
  func.func @_identity_kernel(%arg0: memref<1x128xf32, #tpu.memory_space<vmem>>, %arg1: memref<1x128xf32, #tpu.memory_space<vmem>>) attributes {dimension_semantics = [], scalar_prefetch = 0 : i64, scratch_operands = 0 : i64, tpu.core_type = #tpu.core_type<tc>} {
    %c0 = arith.constant 0 : index
    %c0_0 = arith.constant 0 : index
    %0 = vector.load %arg0[%c0, %c0_0] : memref<1x128xf32, #tpu.memory_space<vmem>>, vector<1x128xf32>
    %c0_1 = arith.constant 0 : index
    %c0_2 = arith.constant 0 : index
    %1 = vector.load %arg1[%c0_1, %c0_2] : memref<1x128xf32, #tpu.memory_space<vmem>>, vector<1x128xf32>
    tpu.vector_store %arg1[%c0_1, %c0_2], %0 {strides = array<i32>} : memref<1x128xf32, #tpu.memory_space<vmem>>, vector<1x128xf32>,
    return
  }
}

</mosaic_0001>

<llo_original>
// kernel: tpu_custom_call.1
$region0: #{tpu_custom_call.1}
  #allocation0 [shape = 'u32[]', space=smem, size = 0x4, offset = 0x4, fixed_abs, tag = 'smem constant byte address 0x4 - core index']
  #allocation1 [shape = 'u32[144,128]{1,0:T(1,128)}', space=vmem, size = 0x12000, scoped, tag = 'internal scratch']
  %s0 = inlined_call_operand.hbm [shape: f32[1,128], index: 0, kind: input, shape index: {}, may-alias: {0,1}]
  %s1 = inlined_call_operand.hbm [shape: f32[1,128], index: 1, kind: output, shape index: {}, may-alias: {0,1}]
  %s2 = sld [smem:[#allocation0]]
  $region18: #{tpu_custom_call.1} parent=0
    _
  %s4 = ssub.s32 1, %s2
  %s5 = scalar_select 0, %s4, %s2
  $region1: #{tpu_custom_call.1} parent=0
    #allocation2 [shape = 'u8[512]{0}', space=vmem, size = 0x400, scoped, tag = 'input window, operand 0, single buffered']
    #allocation3 [shape = 's32[1]{0}', space=sflag, size = 0x4, scoped, tag = 'scoped memory for tpu_custom_call.1']
    #allocation4 [shape = 's32[1]{0}', space=sflag, size = 0x4, scoped, tag = 'scoped memory for tpu_custom_call.1']
    #allocation5 [shape = 'u8[512]{0}', space=vmem, size = 0x400, scoped, tag = 'output window, operand 0, single buffered']
    %6 = vsyncpa [#allocation3], 0
    %7 = vsyncpa [#allocation4], 0
    // Predicated region
    $region2: #{tpu_custom_call.1} parent=1 // pred_check
      _
    $region3: #{tpu_custom_call.1} parent=1 // pred_check_branch
      %9 = sbr.rel (0) target = $region5
    $region4: #{tpu_custom_call.1} parent=1 // pred_region
      %s11 = ssub.s32 16, 16
      %12 = vsyncadd [#allocation3], %s11
      %s14 = sshll.u32 [#allocation2], 4
      %s15 = int_to_ptr.vmem [resolvable:$true] %s14
      %17 = dma.hbm_to_vmem [thread:$0]  %s0, 16, %s15, [#allocation3]
    $region5: #{tpu_custom_call.1} parent=1 // pred_fallthru
      _
    // Predicated region
    $region6: #{tpu_custom_call.1} parent=1 // pred_check
      _
    $region7: #{tpu_custom_call.1} parent=1 // pred_check_branch
      %19 = sbr.rel (0) target = $region9
    $region8: #{tpu_custom_call.1} parent=1 // pred_region
      %20 = dma.done [#allocation3], 16
    $region9: #{tpu_custom_call.1} parent=1 // pred_fallthru
      _
    %v21 = vld [vmem:[#allocation2] sm:$0x1]
    %22 = vst [vmem:[#allocation5] sm:$0x1] %v21
    // Predicated region
    $region10: #{tpu_custom_call.1} parent=1 // pred_check
      _
    $region11: #{tpu_custom_call.1} parent=1 // pred_check_branch
      %24 = sbr.rel (0) target = $region13
    $region12: #{tpu_custom_call.1} parent=1 // pred_region
      %s26 = ssub.s32 16, 16
      %27 = vsyncadd [#allocation4], %s26
      %s29 = sshll.u32 [#allocation5], 4
      %s30 = int_to_ptr.vmem [resolvable:$true] %s29
      %32 = dma.vmem_to_hbm [thread:$0]  %s30, 16, %s1, [#allocation4]
    $region13: #{tpu_custom_call.1} parent=1 // pred_fallthru
      _
    // Predicated region
    $region14: #{tpu_custom_call.1} parent=1 // pred_check
      _
    $region15: #{tpu_custom_call.1} parent=1 // pred_check_branch
      %34 = sbr.rel (0) target = $region17
    $region16: #{tpu_custom_call.1} parent=1 // pred_region
      %35 = dma.done [#allocation4], 16
    $region17: #{tpu_custom_call.1} parent=1 // pred_fallthru
      _
    %36 = vsyncpa [#allocation3], 1
    %37 = vsyncpa [#allocation4], 1

</llo_original>
